<compile_context>
chip_gen: v6e
topology: v6e:2x2x1
jax: 0.10.0
libtpu: 0.0.40
codegen_flags: <defaults>
</compile_context>

<pallas_src>
import functools
import math

import jax
import jax.numpy as jnp
from jax.experimental import pallas as pl
from jax.experimental.pallas import tpu as pltpu


def _round_up(x, m):
    return (x + m - 1) // m * m


def _cdiv(a, b):
    return (a + b - 1) // b


def _vmem_capacity_bytes():
    """Physical per-core VMEM, with a conservative fallback."""
    try:
        return int(pltpu.get_tpu_info().vmem_capacity_bytes)
    except Exception:
        kind = jax.devices()[0].device_kind.lower()
        return (64 << 20) if "v7" in kind else (128 << 20)


def _bf16_elementwise_ok():
    """v6e/v7x have bf16-native VPU/EUP; keep elementwise math f32 on <=v5."""
    kind = jax.devices()[0].device_kind.lower()
    return not any(t in kind for t in ("v2", "v3", "v4", "v5"))


def _highway_kernel(xc_ref, w0_ref, b0_ref, w1_ref, b1_ref,
                    wout_ref, bout_ref, o_ref, *, ew_dtype):
    half = w0_ref.shape[1] // 2          # padded 2*D feature width (lane-aligned)
    x_in = xc_ref[...]                   # (tm, D2p) in compute dtype
    xc = x_in.astype(ew_dtype)

    # Highway layer 0: one fused matmul produces [h | g] along N (f32 MXU acc).
    hg = (jnp.dot(x_in, w0_ref[...], preferred_element_type=jnp.float32)
          + b0_ref[...]).astype(ew_dtype)
    h = jax.nn.relu(hg[:, :half])
    g = jax.nn.sigmoid(hg[:, half:])
    xc = xc + g * (h - xc)               # == g*h + (1-g)*xc, one fewer vmul

    # Highway layer 1.
    hg = (jnp.dot(xc.astype(x_in.dtype), w1_ref[...],
                  preferred_element_type=jnp.float32)
          + b1_ref[...]).astype(ew_dtype)
    h = jax.nn.relu(hg[:, :half])
    g = jax.nn.sigmoid(hg[:, half:])
    xc = xc + g * (h - xc)

    # Output projection 2D -> D (padded, lane-dense -> unmasked vst).
    out = jnp.dot(xc.astype(x_in.dtype), wout_ref[...],
                  preferred_element_type=jnp.float32) + bout_ref[...]
    # TODO(synk): dropout (training=True) not applied — eval semantics only.
    o_ref[...] = out.astype(o_ref.dtype)


def _fuse_hg(wh, bh, wg, bg, d2, d2p, cdtype):
    """Zero-pad W_h/W_g to (d2p, d2p) and fuse along N -> (d2p, 2*d2p).

    NOTE: padding of BOTH weights and biases must stay zero: padded lanes then
    give h = 0 and (h - xc) = 0, so they never leak into real lanes through the
    highway blend even though sigmoid(0) = 0.5.
    """
    pad_w = ((0, d2p - d2), (0, d2p - d2))
    w = jnp.concatenate([jnp.pad(wh, pad_w), jnp.pad(wg, pad_w)], axis=1)
    pad_b = ((0, 0), (0, d2p - d2))
    b = jnp.concatenate([jnp.pad(bh, pad_b), jnp.pad(bg, pad_b)], axis=1)
    return w.astype(cdtype), b.astype(jnp.float32)


def prepare_weights(params, *, compute_dtype=jnp.bfloat16):
    """Fuse / pad / cast the weights ONCE, out of the per-call hot path."""
    (w0h, b0h, w0g, b0g, w1h, b1h, w1g, b1g, wout, bout) = params
    D2 = w0h.shape[0]
    D = wout.shape[1]
    assert D2 == 2 * D
    cdtype = jnp.dtype(compute_dtype)
    D2p = _round_up(D2, 128)
    Dp = _round_up(D, 128)
    w0, b0 = _fuse_hg(w0h, b0h, w0g, b0g, D2, D2p, cdtype)
    w1, b1 = _fuse_hg(w1h, b1h, w1g, b1g, D2, D2p, cdtype)
    wo = jnp.pad(wout, ((0, D2p - D2), (0, Dp - D))).astype(cdtype)
    bo = jnp.pad(bout, ((0, 0), (0, Dp - D))).astype(jnp.float32)
    return dict(w0=w0, b0=b0, w1=w1, b1=b1, wo=wo, bo=bo,
                D=D, D2=D2, D2p=D2p, Dp=Dp, compute_dtype=cdtype)


def highway_net(x, x1, params=None, *, prepared=None, tm=512,
                compute_dtype=jnp.bfloat16, elementwise_dtype=None,
                out_dtype=None):
    """x, x1: (T, B, D). Returns (T, B, D) in out_dtype (default x.dtype)."""
    T, B, D = x.shape
    M = T * B

    if prepared is None:
        prepared = prepare_weights(params, compute_dtype=compute_dtype)
    cdtype = prepared["compute_dtype"]
    assert prepared["D"] == D, "prepared weights do not match input feature dim"
    D2, D2p, Dp = prepared["D2"], prepared["D2p"], prepared["Dp"]
    itemsize = cdtype.itemsize
    out_dtype = jnp.dtype(out_dtype if out_dtype is not None else x.dtype)

    if elementwise_dtype is None:
        elementwise_dtype = (cdtype if (cdtype != jnp.dtype(jnp.float32)
                                        and _bf16_elementwise_ok())
                             else jnp.float32)
    ew_dtype = jnp.dtype(elementwise_dtype)

    # Row tiling: sublane-align, collapse tiny problems to one/two blocks, but
    # aim for >=2 grid steps so both v7x TensorCores get work ("parallel" axis).
    row_align = 8 if itemsize >= 4 else 16
    n_blocks = max(2, _cdiv(M, tm))
    tm_eff = min(_round_up(_cdiv(M, n_blocks), row_align), _round_up(M, row_align))
    tm_eff = max(tm_eff, row_align)

    # Honest VMEM budget: single-buffered resident weights + double-buffered row
    # slabs + in-kernel intermediates (hg/h/g/xc) + Mosaic scratch headroom.
    w_bytes = ((2 * D2p * (2 * D2p) + D2p * Dp) * itemsize
               + (2 * (2 * D2p) + Dp) * 4)

    def _budget(tm_e):
        rows = 2 * tm_e * D2p * itemsize + 2 * tm_e * Dp * out_dtype.itemsize
        interm = tm_e * D2p * (8 + 6 * ew_dtype.itemsize) + tm_e * Dp * 4
        return w_bytes + rows + interm + (4 << 20)

    cap = _vmem_capacity_bytes() - (8 << 20)      # headroom below physical VMEM
    while tm_eff > row_align and _budget(tm_eff) > cap:
        tm_eff = max(_round_up(tm_eff // 2, row_align), row_align)
    Mp = _round_up(M, tm_eff)
    vmem_limit = int(min(max(_budget(tm_eff), 16 << 20), cap))

    # Wrapper-side concat + zero padding -> one (Mp, D2p) input slab.
    xc = jnp.concatenate([x.reshape(M, D), x1.reshape(M, D)], axis=-1)
    xc = jnp.pad(xc, ((0, Mp - M), (0, D2p - D2))).astype(cdtype)

    def _resident(shape):
        # Constant index_map -> the block never changes across the grid; a
        # single buffer (no double-buffering) halves resident weight VMEM.
        return pl.BlockSpec(shape, lambda i: (0, 0), pipeline_mode=pl.Buffered(1))

    out = pl.pallas_call(
        functools.partial(_highway_kernel, ew_dtype=ew_dtype),
        out_shape=jax.ShapeDtypeStruct((Mp, Dp), out_dtype),
        grid_spec=pltpu.PrefetchScalarGridSpec(
            num_scalar_prefetch=0,
            grid=(Mp // tm_eff,),
            in_specs=[
                pl.BlockSpec((tm_eff, D2p), lambda i: (i, 0)),
                _resident((D2p, 2 * D2p)), _resident((1, 2 * D2p)),
                _resident((D2p, 2 * D2p)), _resident((1, 2 * D2p)),
                _resident((D2p, Dp)), _resident((1, Dp)),
            ],
            out_specs=pl.BlockSpec((tm_eff, Dp), lambda i: (i, 0)),
        ),
        compiler_params=pltpu.CompilerParams(
            dimension_semantics=("parallel",),
            vmem_limit_bytes=vmem_limit),
    )(xc, prepared["w0"], prepared["b0"], prepared["w1"], prepared["b1"],
      prepared["wo"], prepared["bo"])

    if Mp == M and Dp == D:
        return out.reshape(T, B, D)
    return out[:M, :D].reshape(T, B, D)


def init_params(key, D):
    """nn.Linear default init (uniform +-1/sqrt(fan_in)).
    Weights stored as (in_features, out_features) — transposed vs PyTorch."""
    D2 = 2 * D
    shapes = [(D2, D2), (D2, D2), (D2, D2), (D2, D2), (D2, D)]
    keys = jax.random.split(key, len(shapes))
    params = []
    for k, shp in zip(keys, shapes):
        fan_in = shp[0]
        bound = 1.0 / math.sqrt(fan_in)
        kw, kb = jax.random.split(k)
        w = jax.random.uniform(kw, shp, jnp.float32, -bound, bound)
        b = jax.random.uniform(kb, (1, shp[1]), jnp.float32, -bound, bound)
        params.extend([w, b])
    return tuple(params)


def highway_net_ref(x, x1, params):
    """Pure-JAX f32 reference for validation."""
    (w0h, b0h, w0g, b0g, w1h, b1h, w1g, b1g, wout, bout) = params
    xc = jnp.concatenate([x, x1], axis=-1).astype(jnp.float32)
    for wh, bh, wg, bg in [(w0h, b0h, w0g, b0g), (w1h, b1h, w1g, b1g)]:
        h = jnp.maximum(xc @ wh + bh, 0.0)
        g = jax.nn.sigmoid(xc @ wg + bg)
        xc = g * h + (1.0 - g) * xc
    return (xc @ wout + bout).astype(x.dtype)


if __name__ == "__main__":
    T, B, D = 8, 2, 32   # seq=8, batch=2, encoder_embed_dim=32
    key = jax.random.PRNGKey(0)
    kx, kx1, kp, kx2, kx12, kp2 = jax.random.split(key, 6)

    x = jax.random.normal(kx, (T, B, D), jnp.float32)
    x1 = jax.random.normal(kx1, (T, B, D), jnp.float32)
    params = init_params(kp, D)
    ref = highway_net_ref(x, x1, params)

    # f32 compute path: tight check against the f32 reference.
    out_f32 = jax.block_until_ready(
        highway_net(x, x1, params, compute_dtype=jnp.float32))
    assert out_f32.shape == (T, B, D)
    assert jnp.allclose(out_f32, ref, atol=1e-5, rtol=1e-5), "f32 mismatch vs reference"

    # bf16 compute path (default), with weight prep hoisted out of the hot path.
    prep = prepare_weights(params)           # done once, reused per call
    out_bf16 = jax.block_until_ready(highway_net(x, x1, prepared=prep))
    assert out_bf16.shape == (T, B, D)
    assert jnp.allclose(out_bf16.astype(jnp.float32), ref,
                        atol=1e-1, rtol=1e-1), "bf16 mismatch vs reference"

    # Larger, non-aligned shape: exercises row padding + multi-block grid.
    T2, B2, D2d = 67, 4, 96          # M = 268 (not a tile multiple), D not 128-aligned
    x2 = jax.random.normal(kx2, (T2, B2, D2d), jnp.float32)
    x12 = jax.random.normal(kx12, (T2, B2, D2d), jnp.float32)
    params2 = init_params(kp2, D2d)
    out2 = jax.block_until_ready(highway_net(x2, x12, params2))
    ref2 = highway_net_ref(x2, x12, params2)
    assert out2.shape == (T2, B2, D2d)
    assert jnp.allclose(out2.astype(jnp.float32), ref2,
                        atol=1e-1, rtol=1e-1), "padded-shape mismatch vs reference"

    print("KERNEL_OK")
</pallas_src>

<mosaic_0001>
module attributes {stable_mosaic.version = 11 : i64} {
  func.func @_highway_kernel(%arg0: i32, %arg1: memref<8x128xf32, #tpu.memory_space<vmem>>, %arg2: memref<128x256xf32, #tpu.memory_space<vmem>>, %arg3: memref<1x256xf32, #tpu.memory_space<vmem>>, %arg4: memref<128x256xf32, #tpu.memory_space<vmem>>, %arg5: memref<1x256xf32, #tpu.memory_space<vmem>>, %arg6: memref<128x128xf32, #tpu.memory_space<vmem>>, %arg7: memref<1x128xf32, #tpu.memory_space<vmem>>, %arg8: memref<8x128xf32, #tpu.memory_space<vmem>>) attributes {dimension_semantics = [#tpu.dimension_semantics<parallel>], iteration_bounds = array<i64: 2>, scalar_prefetch = 0 : i64, scratch_operands = 0 : i64, tpu.core_type = #tpu.core_type<tc>, window_params = [{transform_indices = @transform_0, window_bounds = array<i64: 8, 128>}, {pipeline_mode = #tpu.pipeline_mode<synchronous>, transform_indices = @transform_1, window_bounds = array<i64: 128, 256>}, {pipeline_mode = #tpu.pipeline_mode<synchronous>, transform_indices = @transform_2, window_bounds = array<i64: 1, 256>}, {pipeline_mode = #tpu.pipeline_mode<synchronous>, transform_indices = @transform_3, window_bounds = array<i64: 128, 256>}, {pipeline_mode = #tpu.pipeline_mode<synchronous>, transform_indices = @transform_4, window_bounds = array<i64: 1, 256>}, {pipeline_mode = #tpu.pipeline_mode<synchronous>, transform_indices = @transform_5, window_bounds = array<i64: 128, 128>}, {pipeline_mode = #tpu.pipeline_mode<synchronous>, transform_indices = @transform_6, window_bounds = array<i64: 1, 128>}, {transform_indices = @transform_7, window_bounds = array<i64: 8, 128>}]} {
    %c0 = arith.constant 0 : index
    %c0_0 = arith.constant 0 : index
    %0 = vector.load %arg1[%c0, %c0_0] : memref<8x128xf32, #tpu.memory_space<vmem>>, vector<8x128xf32>
    %c0_1 = arith.constant 0 : index
    %c0_2 = arith.constant 0 : index
    %1 = vector.load %arg2[%c0_1, %c0_2] : memref<128x256xf32, #tpu.memory_space<vmem>>, vector<128x256xf32>
    %cst = arith.constant dense<0.000000e+00> : vector<8x256xf32>
    %2 = tpu.matmul %0, %1, %cst {dimension_numbers = #tpu.dot_dimension_numbers<[1], [0], [0], [1], [0, 0, 1, 1], [], []>} : vector<8x128xf32>, vector<128x256xf32>, vector<8x256xf32> -> vector<8x256xf32>
    %c0_3 = arith.constant 0 : index
    %c0_4 = arith.constant 0 : index
    %3 = vector.load %arg3[%c0_3, %c0_4] : memref<1x256xf32, #tpu.memory_space<vmem>>, vector<1x256xf32>
    %4 = vector.broadcast %3 : vector<1x256xf32> to vector<8x256xf32>
    %5 = arith.addf %2, %4 : vector<8x256xf32>
    %6 = vector.extract_strided_slice %5 {offsets = [0, 0], sizes = [8, 128], strides = [1, 1]} : vector<8x256xf32> to vector<8x128xf32>
    %cst_5 = arith.constant 0.000000e+00 : f32
    %7 = vector.broadcast %cst_5 : f32 to vector<8x128xf32>
    %8 = arith.maximumf %6, %7 : vector<8x128xf32>
    %9 = vector.extract_strided_slice %5 {offsets = [0, 128], sizes = [8, 128], strides = [1, 1]} : vector<8x256xf32> to vector<8x128xf32>
    %10 = arith.negf %9 : vector<8x128xf32>
    %11 = math.exp %10 : vector<8x128xf32>
    %cst_6 = arith.constant 1.000000e+00 : f32
    %12 = vector.broadcast %cst_6 : f32 to vector<8x128xf32>
    %13 = arith.addf %12, %11 : vector<8x128xf32>
    %14 = arith.divf %12, %13 : vector<8x128xf32>
    %15 = arith.subf %8, %0 : vector<8x128xf32>
    %16 = arith.mulf %14, %15 : vector<8x128xf32>
    %17 = arith.addf %0, %16 : vector<8x128xf32>
    %c0_7 = arith.constant 0 : index
    %c0_8 = arith.constant 0 : index
    %18 = vector.load %arg4[%c0_7, %c0_8] : memref<128x256xf32, #tpu.memory_space<vmem>>, vector<128x256xf32>
    %cst_9 = arith.constant dense<0.000000e+00> : vector<8x256xf32>
    %19 = tpu.matmul %17, %18, %cst_9 {dimension_numbers = #tpu.dot_dimension_numbers<[1], [0], [0], [1], [0, 0, 1, 1], [], []>} : vector<8x128xf32>, vector<128x256xf32>, vector<8x256xf32> -> vector<8x256xf32>
    %c0_10 = arith.constant 0 : index
    %c0_11 = arith.constant 0 : index
    %20 = vector.load %arg5[%c0_10, %c0_11] : memref<1x256xf32, #tpu.memory_space<vmem>>, vector<1x256xf32>
    %21 = vector.broadcast %20 : vector<1x256xf32> to vector<8x256xf32>
    %22 = arith.addf %19, %21 : vector<8x256xf32>
    %23 = vector.extract_strided_slice %22 {offsets = [0, 0], sizes = [8, 128], strides = [1, 1]} : vector<8x256xf32> to vector<8x128xf32>
    %cst_12 = arith.constant 0.000000e+00 : f32
    %24 = vector.broadcast %cst_12 : f32 to vector<8x128xf32>
    %25 = arith.maximumf %23, %24 : vector<8x128xf32>
    %26 = vector.extract_strided_slice %22 {offsets = [0, 128], sizes = [8, 128], strides = [1, 1]} : vector<8x256xf32> to vector<8x128xf32>
    %27 = arith.negf %26 : vector<8x128xf32>
    %28 = math.exp %27 : vector<8x128xf32>
    %cst_13 = arith.constant 1.000000e+00 : f32
    %29 = vector.broadcast %cst_13 : f32 to vector<8x128xf32>
    %30 = arith.addf %29, %28 : vector<8x128xf32>
    %31 = arith.divf %29, %30 : vector<8x128xf32>
    %32 = arith.subf %25, %17 : vector<8x128xf32>
    %33 = arith.mulf %31, %32 : vector<8x128xf32>
    %34 = arith.addf %17, %33 : vector<8x128xf32>
    %c0_14 = arith.constant 0 : index
    %c0_15 = arith.constant 0 : index
    %35 = vector.load %arg6[%c0_14, %c0_15] : memref<128x128xf32, #tpu.memory_space<vmem>>, vector<128x128xf32>
    %cst_16 = arith.constant dense<0.000000e+00> : vector<8x128xf32>
    %36 = tpu.matmul %34, %35, %cst_16 {dimension_numbers = #tpu.dot_dimension_numbers<[1], [0], [0], [1], [0, 0, 1, 1], [], []>} : vector<8x128xf32>, vector<128x128xf32>, vector<8x128xf32> -> vector<8x128xf32>
    %c0_17 = arith.constant 0 : index
    %c0_18 = arith.constant 0 : index
    %37 = vector.load %arg7[%c0_17, %c0_18] : memref<1x128xf32, #tpu.memory_space<vmem>>, vector<1x128xf32>
    %38 = vector.broadcast %37 : vector<1x128xf32> to vector<8x128xf32>
    %39 = arith.addf %36, %38 : vector<8x128xf32>
    %c0_19 = arith.constant 0 : index
    %c0_20 = arith.constant 0 : index
    %40 = vector.load %arg8[%c0_19, %c0_20] : memref<8x128xf32, #tpu.memory_space<vmem>>, vector<8x128xf32>
    tpu.vector_store %arg8[%c0_19, %c0_20], %39 {strides = array<i32>} : memref<8x128xf32, #tpu.memory_space<vmem>>, vector<8x128xf32>,
    return
  }
  func.func @transform_0(%arg0: i32) -> (i32, i32) {
    %c0_i32 = arith.constant 0 : i32
    %c0_i32_0 = arith.constant 0 : i32
    return %arg0, %c0_i32 : i32, i32
  }
  func.func @transform_1(%arg0: i32) -> (i32, i32) {
    %c0_i32 = arith.constant 0 : i32
    %c0_i32_0 = arith.constant 0 : i32
    %c0_i32_1 = arith.constant 0 : i32
    return %c0_i32, %c0_i32_0 : i32, i32
  }
  func.func @transform_2(%arg0: i32) -> (i32, i32) {
    %c0_i32 = arith.constant 0 : i32
    %c0_i32_0 = arith.constant 0 : i32
    %c0_i32_1 = arith.constant 0 : i32
    return %c0_i32, %c0_i32_0 : i32, i32
  }
  func.func @transform_3(%arg0: i32) -> (i32, i32) {
    %c0_i32 = arith.constant 0 : i32
    %c0_i32_0 = arith.constant 0 : i32
    %c0_i32_1 = arith.constant 0 : i32
    return %c0_i32, %c0_i32_0 : i32, i32
  }
  func.func @transform_4(%arg0: i32) -> (i32, i32) {
    %c0_i32 = arith.constant 0 : i32
    %c0_i32_0 = arith.constant 0 : i32
    %c0_i32_1 = arith.constant 0 : i32
    return %c0_i32, %c0_i32_0 : i32, i32
  }
  func.func @transform_5(%arg0: i32) -> (i32, i32) {
    %c0_i32 = arith.constant 0 : i32
    %c0_i32_0 = arith.constant 0 : i32
    %c0_i32_1 = arith.constant 0 : i32
    return %c0_i32, %c0_i32_0 : i32, i32
  }
  func.func @transform_6(%arg0: i32) -> (i32, i32) {
    %c0_i32 = arith.constant 0 : i32
    %c0_i32_0 = arith.constant 0 : i32
    %c0_i32_1 = arith.constant 0 : i32
    return %c0_i32, %c0_i32_0 : i32, i32
  }
  func.func @transform_7(%arg0: i32) -> (i32, i32) {
    %c0_i32 = arith.constant 0 : i32
    %c0_i32_0 = arith.constant 0 : i32
    return %arg0, %c0_i32 : i32, i32
  }
}

</mosaic_0001>

<llo_original>
// kernel: tpu_custom_call.1
$region0: #{tpu_custom_call.1}
  #allocation0 [shape = 'u32[]', space=smem, size = 0x4, offset = 0x4, fixed_abs, tag = 'smem constant byte address 0x4 - core index']
  #allocation1 [shape = 'u32[144,128]{1,0:T(1,128)}', space=vmem, size = 0x12000, scoped, tag = 'internal scratch']
  %s0 = inlined_call_operand.hbm [shape: f32[16,128], index: 0, kind: input, shape index: {}]
  %s1 = inlined_call_operand.hbm [shape: f32[128,256], index: 1, kind: input, shape index: {}]
  %s2 = inlined_call_operand.vmem [shape: f32[1,256], index: 2, kind: input, shape index: {}]
  %s3 = inlined_call_operand.hbm [shape: f32[128,256], index: 3, kind: input, shape index: {}]
  %s4 = inlined_call_operand.vmem [shape: f32[1,256], index: 4, kind: input, shape index: {}]
  %s5 = inlined_call_operand.hbm [shape: f32[128,128], index: 5, kind: input, shape index: {}]
  %s6 = inlined_call_operand.vmem [shape: f32[1,128], index: 6, kind: input, shape index: {}]
  %s7 = inlined_call_operand.hbm [shape: f32[16,128], index: 7, kind: output, shape index: {}]
  %s8 = sld [smem:[#allocation0]]
  $region77: #{tpu_custom_call.1} parent=0
    _
  %s10 = ssub.s32 1, %s8
  %s11 = scalar_select 0, %s10, %s8
  $region1: #{tpu_custom_call.1} parent=0
    #allocation2 [shape = 'u8[8192]{0}', space=vmem, size = 0x2000, scoped, tag = 'input window, operand 0']
    #allocation3 [shape = 's32[2]{0}', space=sflag, size = 0x8, scoped, tag = 'scoped memory for tpu_custom_call.1']
    #allocation4 [shape = 's32[2]{0}', space=sflag, size = 0x8, scoped, tag = 'scoped memory for tpu_custom_call.1']
    #allocation5 [shape = 'u8[131072]{0}', space=vmem, size = 0x20000, scoped, tag = 'input window, operand 1, single buffered']
    #allocation6 [shape = 's32[1]{0}', space=sflag, size = 0x4, scoped, tag = 'scoped memory for tpu_custom_call.1']
    #allocation7 [shape = 'u8[131072]{0}', space=vmem, size = 0x20000, scoped, tag = 'input window, operand 3, single buffered']
    #allocation8 [shape = 'u8[65536]{0}', space=vmem, size = 0x10000, scoped, tag = 'input window, operand 5, single buffered']
    #allocation9 [shape = 's32[1]{0}', space=sflag, size = 0x4, scoped, tag = 'scoped memory for tpu_custom_call.1']
    #allocation10 [shape = 'u8[8192]{0}', space=vmem, size = 0x2000, scoped, tag = 'output window, operand 0']
    %12 = vsyncpa [#allocation3], 0
    %s13 = scalar_lea.sflag [#allocation3], 1
    %14 = vsyncpa %s13, 0
    %15 = vsyncpa [#allocation6], 0
    %16 = vsyncpa [#allocation9], 0
    %17 = vsyncpa [#allocation4], 0
    %s18 = scalar_lea.sflag [#allocation4], 1
    %19 = vsyncpa %s18, 0
    loop: start=0, step=1, limit=4
    $region2: #{tpu_custom_call.1} parent=1 // loop_pre_header
      _
    $region3: #{tpu_custom_call.1} parent=1 // loop_header
      %s21 = sphi 0, %s25
      %p22 = scmp.ge.s32.totalorder %s21, 4
      %s31 = sphi 0, %s33
      %s34 = sphi 0, %s31
      %s35 = sphi 0, %s34
      %s51 = sphi 0, %s35
      %s55 = sphi 0, %s55
      %s57 = sphi 0, %s55
      %s58 = sphi 0, %s57
      %s72 = sphi 0, %s58
      %s76 = sphi 0, %s76
      %s78 = sphi 0, %s76
      %s79 = sphi 0, %s78
      %s93 = sphi 0, %s79
      %s97 = sphi 0, %s97
      %s99 = sphi 0, %s97
      %s100 = sphi 0, %s99
      %s114 = sphi 0, %s100
      %s118 = sphi 0, %s118
      %s120 = sphi 0, %s118
      %s121 = sphi 0, %s120
      %s135 = sphi 0, %s121
      %s139 = sphi 0, %s139
      %s141 = sphi 0, %s139
      %s142 = sphi 0, %s141
      %s156 = sphi 0, %s142
      %s160 = sphi 0, %s160
      %s162 = sphi 0, %s160
      %s163 = sphi 0, %s162
      %s177 = sphi 0, %s163
      %s183 = sphi 0, %s185
      %s186 = sphi 0, %s183
      %s187 = sphi 0, %s186
      %s203 = sphi 0, %s187
    $region4: #{tpu_custom_call.1} parent=1 // loop_header_branch
      %24 = sbr.rel (%p22) target = $region8
    $region5: #{tpu_custom_call.1} parent=1 // loop_body
      %s26 = ssub.s32 %s21, 1
      %s27 = ssub.s32 %s21, 2
      %s28 = sadd.s32 %s21, 1
      %s29 = ssub.s32 %s21, %s28
      %p30 = scmp.eq.s32.totalorder %s29, 0
      %s32 = sadd.s32 %s31, 1
      %s33 = scalar_select %p30, %s31, %s32
      %p36 = pneg %p30
      %p37 = scmp.eq.s32.totalorder %s21, 1
      %p38 = por %p36, %p37
      %p39 = scmp.ne.s32.totalorder %s31, %s34
      %p40 = scmp.eq.s32.totalorder %s21, 0
      %p41 = por %p39, %p40
      %p42 = scmp.ne.s32.totalorder %s31, %s34
      %p43 = scmp.eq.s32.totalorder %s26, 1
      %p44 = por %p42, %p43
      %p45 = scmp.ne.s32.totalorder %s34, %s35
      %p46 = scmp.eq.s32.totalorder %s26, 0
      %p47 = por %p45, %p46
      %p48 = scmp.ne.s32.totalorder %s34, %s35
      %p49 = scmp.eq.s32.totalorder %s27, 1
      %p50 = por %p48, %p49
      %p52 = scmp.ne.s32.totalorder %s35, %s51
      %p53 = scmp.eq.s32.totalorder %s27, 0
      %p54 = por %p52, %p53
      %s56 = sadd.s32 %s55, 1
      %p59 = scmp.eq.s32.totalorder %s21, 1
      %p60 = scmp.ne.s32.totalorder %s55, %s57
      %p61 = scmp.eq.s32.totalorder %s21, 0
      %p62 = por %p60, %p61
      %p63 = scmp.ne.s32.totalorder %s55, %s57
      %p64 = scmp.eq.s32.totalorder %s26, 1
      %p65 = por %p63, %p64
      %p66 = scmp.ne.s32.totalorder %s57, %s58
      %p67 = scmp.eq.s32.totalorder %s26, 0
      %p68 = por %p66, %p67
      %p69 = scmp.ne.s32.totalorder %s57, %s58
      %p70 = scmp.eq.s32.totalorder %s27, 1
      %p71 = por %p69, %p70
      %p73 = scmp.ne.s32.totalorder %s58, %s72
      %p74 = scmp.eq.s32.totalorder %s27, 0
      %p75 = por %p73, %p74
      %s77 = sadd.s32 %s76, 1
      %p80 = scmp.eq.s32.totalorder %s21, 1
      %p81 = scmp.ne.s32.totalorder %s76, %s78
      %p82 = scmp.eq.s32.totalorder %s21, 0
      %p83 = por %p81, %p82
      %p84 = scmp.ne.s32.totalorder %s76, %s78
      %p85 = scmp.eq.s32.totalorder %s26, 1
      %p86 = por %p84, %p85
      %p87 = scmp.ne.s32.totalorder %s78, %s79
      %p88 = scmp.eq.s32.totalorder %s26, 0
      %p89 = por %p87, %p88
      %p90 = scmp.ne.s32.totalorder %s78, %s79
      %p91 = scmp.eq.s32.totalorder %s27, 1
      %p92 = por %p90, %p91
      %p94 = scmp.ne.s32.totalorder %s79, %s93
      %p95 = scmp.eq.s32.totalorder %s27, 0
      %p96 = por %p94, %p95
      %s98 = sadd.s32 %s97, 1
      %p101 = scmp.eq.s32.totalorder %s21, 1
      %p102 = scmp.ne.s32.totalorder %s97, %s99
      %p103 = scmp.eq.s32.totalorder %s21, 0
      %p104 = por %p102, %p103
      %p105 = scmp.ne.s32.totalorder %s97, %s99
      %p106 = scmp.eq.s32.totalorder %s26, 1
      %p107 = por %p105, %p106
      %p108 = scmp.ne.s32.totalorder %s99, %s100
      %p109 = scmp.eq.s32.totalorder %s26, 0
      %p110 = por %p108, %p109
      %p111 = scmp.ne.s32.totalorder %s99, %s100
      %p112 = scmp.eq.s32.totalorder %s27, 1
      %p113 = por %p111, %p112
      %p115 = scmp.ne.s32.totalorder %s100, %s114
      %p116 = scmp.eq.s32.totalorder %s27, 0
      %p117 = por %p115, %p116
      %s119 = sadd.s32 %s118, 1
      %p122 = scmp.eq.s32.totalorder %s21, 1
      %p123 = scmp.ne.s32.totalorder %s118, %s120
      %p124 = scmp.eq.s32.totalorder %s21, 0
      %p125 = por %p123, %p124
      %p126 = scmp.ne.s32.totalorder %s118, %s120
      %p127 = scmp.eq.s32.totalorder %s26, 1
      %p128 = por %p126, %p127
      %p129 = scmp.ne.s32.totalorder %s120, %s121
      %p130 = scmp.eq.s32.totalorder %s26, 0
      %p131 = por %p129, %p130
      %p132 = scmp.ne.s32.totalorder %s120, %s121
      %p133 = scmp.eq.s32.totalorder %s27, 1
      %p134 = por %p132, %p133
      %p136 = scmp.ne.s32.totalorder %s121, %s135
      %p137 = scmp.eq.s32.totalorder %s27, 0
      %p138 = por %p136, %p137
      %s140 = sadd.s32 %s139, 1
      %p143 = scmp.eq.s32.totalorder %s21, 1
      %p144 = scmp.ne.s32.totalorder %s139, %s141
      %p145 = scmp.eq.s32.totalorder %s21, 0
      %p146 = por %p144, %p145
      %p147 = scmp.ne.s32.totalorder %s139, %s141
      %p148 = scmp.eq.s32.totalorder %s26, 1
      %p149 = por %p147, %p148
      %p150 = scmp.ne.s32.totalorder %s141, %s142
      %p151 = scmp.eq.s32.totalorder %s26, 0
      %p152 = por %p150, %p151
      %p153 = scmp.ne.s32.totalorder %s141, %s142
      %p154 = scmp.eq.s32.totalorder %s27, 1
      %p155 = por %p153, %p154
      %p157 = scmp.ne.s32.totalorder %s142, %s156
      %p158 = scmp.eq.s32.totalorder %s27, 0
      %p159 = por %p157, %p158
      %s161 = sadd.s32 %s160, 1
      %p164 = scmp.eq.s32.totalorder %s21, 1
      %p165 = scmp.ne.s32.totalorder %s160, %s162
      %p166 = scmp.eq.s32.totalorder %s21, 0
      %p167 = por %p165, %p166
      %p168 = scmp.ne.s32.totalorder %s160, %s162
      %p169 = scmp.eq.s32.totalorder %s26, 1
      %p170 = por %p168, %p169
      %p171 = scmp.ne.s32.totalorder %s162, %s163
      %p172 = scmp.eq.s32.totalorder %s26, 0
      %p173 = por %p171, %p172
      %p174 = scmp.ne.s32.totalorder %s162, %s163
      %p175 = scmp.eq.s32.totalorder %s27, 1
      %p176 = por %p174, %p175
      %p178 = scmp.ne.s32.totalorder %s163, %s177
      %p179 = scmp.eq.s32.totalorder %s27, 0
      %p180 = por %p178, %p179
      %s181 = ssub.s32 %s21, %s28
      %p182 = scmp.eq.s32.totalorder %s181, 0
      %s184 = sadd.s32 %s183, 1
      %s185 = scalar_select %p182, %s183, %s184
      %p188 = pneg %p182
      %p189 = scmp.eq.s32.totalorder %s21, 1
      %p190 = por %p188, %p189
      %p191 = scmp.ne.s32.totalorder %s183, %s186
      %p192 = scmp.eq.s32.totalorder %s21, 0
      %p193 = por %p191, %p192
      %p194 = scmp.ne.s32.totalorder %s183, %s186
      %p195 = scmp.eq.s32.totalorder %s26, 1
      %p196 = por %p194, %p195
      %p197 = scmp.ne.s32.totalorder %s186, %s187
      %p198 = scmp.eq.s32.totalorder %s26, 0
      %p199 = por %p197, %p198
      %p200 = scmp.ne.s32.totalorder %s186, %s187
      %p201 = scmp.eq.s32.totalorder %s27, 1
      %p202 = por %p200, %p201
      %p204 = scmp.ne.s32.totalorder %s187, %s203
      %p205 = scmp.eq.s32.totalorder %s27, 0
      %p206 = por %p204, %p205
      %p207 = scmp.le.s32.totalorder 1, %s21
      %p208 = scmp.lt.s32.totalorder %s21, 3
      %p209 = pnand %p207, %p208
      %p210 = pneg %p209
      // Predicated region
      $region9: #{tpu_custom_call.1} parent=5 // pred_check
        _
      $region10: #{tpu_custom_call.1} parent=5 // pred_check_branch
        %212 = sbr.rel (%p209) target = $region12
      $region11: #{tpu_custom_call.1} parent=5 // pred_region
        %s213 = ssub.s32 %s21, 1
        // Predicated region
        $region13: #{tpu_custom_call.1} parent=11 // pred_check
          %p214 = pneg %p68
        $region14: #{tpu_custom_call.1} parent=11 // pred_check_branch
          %216 = sbr.rel (%p214) target = $region16
        $region15: #{tpu_custom_call.1} parent=11 // pred_region
          %s218 = ssub.s32 4096, 4096
          %219 = vsyncadd [#allocation6], %s218
          %s220 = sshll.u32 [#allocation5], 4
          %s221 = int_to_ptr.vmem [resolvable:$true] %s220
          %226 = dma.hbm_to_vmem [thread:$0]  %s1, 4096, %s221, [#allocation6], 256, 256, 16
        $region16: #{tpu_custom_call.1} parent=11 // pred_fallthru
          _
        // Predicated region
        $region17: #{tpu_custom_call.1} parent=11 // pred_check
          %p227 = pneg %p89
        $region18: #{tpu_custom_call.1} parent=11 // pred_check_branch
          %229 = sbr.rel (%p227) target = $region20
        $region19: #{tpu_custom_call.1} parent=11 // pred_region
          _
        $region20: #{tpu_custom_call.1} parent=11 // pred_fallthru
          _
        // Predicated region
        $region21: #{tpu_custom_call.1} parent=11 // pred_check
          %p230 = pneg %p110
        $region22: #{tpu_custom_call.1} parent=11 // pred_check_branch
          %232 = sbr.rel (%p230) target = $region24
        $region23: #{tpu_custom_call.1} parent=11 // pred_region
          %s234 = ssub.s32 4096, 4096
          %235 = vsyncadd [#allocation6], %s234
          %s236 = sshll.u32 [#allocation7], 4
          %s237 = int_to_ptr.vmem [resolvable:$true] %s236
          %242 = dma.hbm_to_vmem [thread:$0]  %s3, 4096, %s237, [#allocation6], 256, 256, 16
        $region24: #{tpu_custom_call.1} parent=11 // pred_fallthru
          _
        // Predicated region
        $region25: #{tpu_custom_call.1} parent=11 // pred_check
          %p243 = pneg %p131
        $region26: #{tpu_custom_call.1} parent=11 // pred_check_branch
          %245 = sbr.rel (%p243) target = $region28
        $region27: #{tpu_custom_call.1} parent=11 // pred_region
          _
        $region28: #{tpu_custom_call.1} parent=11 // pred_fallthru
          _
        // Predicated region
        $region29: #{tpu_custom_call.1} parent=11 // pred_check
          %p246 = pneg %p152
        $region30: #{tpu_custom_call.1} parent=11 // pred_check_branch
          %248 = sbr.rel (%p246) target = $region32
        $region31: #{tpu_custom_call.1} parent=11 // pred_region
          %s250 = ssub.s32 2048, 2048
          %251 = vsyncadd [#allocation9], %s250
          %s252 = sshll.u32 [#allocation8], 4
          %s253 = int_to_ptr.vmem [resolvable:$true] %s252
          %258 = dma.hbm_to_vmem [thread:$0]  %s5, 2048, %s253, [#allocation9], 128, 128, 8
        $region32: #{tpu_custom_call.1} parent=11 // pred_fallthru
          _
        // Predicated region
        $region33: #{tpu_custom_call.1} parent=11 // pred_check
          %p259 = pneg %p173
        $region34: #{tpu_custom_call.1} parent=11 // pred_check_branch
          %261 = sbr.rel (%p259) target = $region36
        $region35: #{tpu_custom_call.1} parent=11 // pred_region
          _
        $region36: #{tpu_custom_call.1} parent=11 // pred_fallthru
          _
      $region12: #{tpu_custom_call.1} parent=5 // pred_fallthru
        _
      %p262 = scmp.lt.s32.totalorder %s21, 2
      // Predicated region
      $region37: #{tpu_custom_call.1} parent=5 // pred_check
        %p263 = pneg %p262
      $region38: #{tpu_custom_call.1} parent=5 // pred_check_branch
        %265 = sbr.rel (%p263) target = $region40
      $region39: #{tpu_custom_call.1} parent=5 // pred_region
        // Predicated region
        $region41: #{tpu_custom_call.1} parent=39 // pred_check
          %p266 = pneg %p41
        $region42: #{tpu_custom_call.1} parent=39 // pred_check_branch
          %268 = sbr.rel (%p266) target = $region44
        $region43: #{tpu_custom_call.1} parent=39 // pred_region
          %s269 = sand.u32 %s31, 1
          %s270 = scalar_lea.sflag [#allocation3], %s269
          %s271 = sand.u32 %s31, 1
          %s272 = smul.addr %s271, 8
          %s273 = scalar_lea.vmem [#allocation2], %s272
          %s275 = ssub.s32 128, 128
          %276 = vsyncadd %s270, %s275
          %s277 = smul.addr %s21, 128
          %s278 = scalar_lea.hbm %s0, %s277
          %s280 = sshll.u32 %s273, 4
          %s281 = int_to_ptr.vmem [resolvable:$true] %s280
          %283 = dma.hbm_to_vmem [thread:$0]  %s278, 128, %s281, %s270
        $region44: #{tpu_custom_call.1} parent=39 // pred_fallthru
          _
      $region40: #{tpu_custom_call.1} parent=5 // pred_fallthru
        _
      %p284 = scmp.le.s32.totalorder 1, %s21
      %p285 = scmp.lt.s32.totalorder %s21, 3
      %p286 = pnand %p284, %p285
      %p287 = pneg %p286
      // Predicated region
      $region45: #{tpu_custom_call.1} parent=5 // pred_check
        _
      $region46: #{tpu_custom_call.1} parent=5 // pred_check_branch
        %289 = sbr.rel (%p286) target = $region48
      $region47: #{tpu_custom_call.1} parent=5 // pred_region
        %s290 = ssub.s32 %s21, 1
        %s291 = sand.u32 %s34, 1
        %s292 = scalar_lea.sflag [#allocation3], %s291
        %s293 = sand.u32 %s34, 1
        %s294 = smul.addr %s293, 8
        %s295 = scalar_lea.vmem [#allocation2], %s294
        // Predicated region
        $region49: #{tpu_custom_call.1} parent=47 // pred_check
          %p296 = pneg %p47
        $region50: #{tpu_custom_call.1} parent=47 // pred_check_branch
          %298 = sbr.rel (%p296) target = $region52
        $region51: #{tpu_custom_call.1} parent=47 // pred_region
          %299 = dma.done %s292, 128
        $region52: #{tpu_custom_call.1} parent=47 // pred_fallthru
          _
        // Predicated region
        $region53: #{tpu_custom_call.1} parent=47 // pred_check
          %p300 = pneg %p68
        $region54: #{tpu_custom_call.1} parent=47 // pred_check_branch
          %302 = sbr.rel (%p300) target = $region56
        $region55: #{tpu_custom_call.1} parent=47 // pred_region
          %303 = dma.done [#allocation6], 4096
        $region56: #{tpu_custom_call.1} parent=47 // pred_fallthru
          _
        // Predicated region
        $region57: #{tpu_custom_call.1} parent=47 // pred_check
          %p304 = pneg %p110
        $region58: #{tpu_custom_call.1} parent=47 // pred_check_branch
          %306 = sbr.rel (%p304) target = $region60
        $region59: #{tpu_custom_call.1} parent=47 // pred_region
          %307 = dma.done [#allocation6], 4096
        $region60: #{tpu_custom_call.1} parent=47 // pred_fallthru
          _
        // Predicated region
        $region61: #{tpu_custom_call.1} parent=47 // pred_check
          %p308 = pneg %p152
        $region62: #{tpu_custom_call.1} parent=47 // pred_check_branch
          %310 = sbr.rel (%p308) target = $region64
        $region63: #{tpu_custom_call.1} parent=47 // pred_region
          %311 = dma.done [#allocation9], 2048
        $region64: #{tpu_custom_call.1} parent=47 // pred_fallthru
          _
        %s312 = sand.u32 %s34, 1
        %s313 = scalar_lea.sflag [#allocation3], %s312
        %s314 = sand.u32 %s34, 1
        %s315 = smul.addr %s314, 8
        %s316 = scalar_lea.vmem [#allocation2], %s315
        %p317 = pneg %p47
        %p318 = pneg %p44
        %p319 = pneg %p68
        %p320 = pneg %p65
        %p321 = pneg %p89
        %p322 = pneg %p86
        %p323 = pneg %p110
        %p324 = pneg %p107
        %p325 = pneg %p131
        %p326 = pneg %p128
        %p327 = pneg %p152
        %p328 = pneg %p149
        %p329 = pneg %p173
        %p330 = pneg %p170
        %p331 = pneg %p199
        %p332 = pneg %p196
        %s333 = sand.u32 %s186, 1
        %s334 = scalar_lea.sflag [#allocation4], %s333
        %s335 = sand.u32 %s186, 1
        %s336 = smul.addr %s335, 8
        %s337 = scalar_lea.vmem [#allocation10], %s336
        %v338 = vld [vmem:[%s295] sm:$0xff]
        %v339 = vld [vmem:[#allocation5] sm:$0xff]
        %v340 = vld [vmem:[#allocation5 + $0x8] sm:$0xff]
        %v341 = vld [vmem:[#allocation5 + $0x10] sm:$0xff]
        %v342 = vld [vmem:[#allocation5 + $0x18] sm:$0xff]
        %v343 = vld [vmem:[#allocation5 + $0x20] sm:$0xff]
        %v344 = vld [vmem:[#allocation5 + $0x28] sm:$0xff]
        %v345 = vld [vmem:[#allocation5 + $0x30] sm:$0xff]
        %v346 = vld [vmem:[#allocation5 + $0x38] sm:$0xff]
        %v347 = vld [vmem:[#allocation5 + $0x40] sm:$0xff]
        %v348 = vld [vmem:[#allocation5 + $0x48] sm:$0xff]
        %v349 = vld [vmem:[#allocation5 + $0x50] sm:$0xff]
        %v350 = vld [vmem:[#allocation5 + $0x58] sm:$0xff]
        %v351 = vld [vmem:[#allocation5 + $0x60] sm:$0xff]
        %v352 = vld [vmem:[#allocation5 + $0x68] sm:$0xff]
        %v353 = vld [vmem:[#allocation5 + $0x70] sm:$0xff]
        %v354 = vld [vmem:[#allocation5 + $0x78] sm:$0xff]
        %v355 = vld [vmem:[#allocation5 + $0x80] sm:$0xff]
        %v356 = vld [vmem:[#allocation5 + $0x88] sm:$0xff]
        %v357 = vld [vmem:[#allocation5 + $0x90] sm:$0xff]
        %v358 = vld [vmem:[#allocation5 + $0x98] sm:$0xff]
        %v359 = vld [vmem:[#allocation5 + $0xa0] sm:$0xff]
        %v360 = vld [vmem:[#allocation5 + $0xa8] sm:$0xff]
        %v361 = vld [vmem:[#allocation5 + $0xb0] sm:$0xff]
        %v362 = vld [vmem:[#allocation5 + $0xb8] sm:$0xff]
        %v363 = vld [vmem:[#allocation5 + $0xc0] sm:$0xff]
        %v364 = vld [vmem:[#allocation5 + $0xc8] sm:$0xff]
        %v365 = vld [vmem:[#allocation5 + $0xd0] sm:$0xff]
        %v366 = vld [vmem:[#allocation5 + $0xd8] sm:$0xff]
        %v367 = vld [vmem:[#allocation5 + $0xe0] sm:$0xff]
        %v368 = vld [vmem:[#allocation5 + $0xe8] sm:$0xff]
        %v369 = vld [vmem:[#allocation5 + $0xf0] sm:$0xff]
        %v370 = vld [vmem:[#allocation5 + $0xf8] sm:$0xff]
        %v371 = vld [vmem:[%s2] sm:$0x3]
        %v373 = vlaneseq
        %v374 = vshrl.u32 %v373, 7
        %v375 = vsub.s32 0, %v374
        %v376 = vrot.slane %v371, %v375
        %v377 = vlaneseq
        %v378 = vshrl.u32 %v377, 7
        %v379 = vsub.s32 1, %v378
        %v380 = vrot.slane %v371, %v379
        %383 = vmatprep.subr.mxu0 %v370
        %384 = vmatpush1.msra.mxu0 %v369
        %385 = vmatprep.subr.mxu0 %v368
        %386 = vmatpush1.msra.mxu0 %v367
        %387 = vmatprep.subr.mxu0 %v366
        %388 = vmatpush1.msra.mxu0 %v365
        %389 = vmatprep.subr.mxu0 %v364
        %390 = vmatpush1.msra.mxu0 %v363
        %391 = vmatprep.subr.mxu0 %v362
        %392 = vmatpush1.msra.mxu0 %v361
        %393 = vmatprep.subr.mxu0 %v360
        %394 = vmatpush1.msra.mxu0 %v359
        %395 = vmatprep.subr.mxu0 %v358
        %396 = vmatpush1.msra.mxu0 %v357
        %397 = vmatprep.subr.mxu0 %v356
        %398 = vmatpush1.msra.mxu0 %v355
        %399 = vmatprep.subr.mxu0 %v354
        %400 = vmatpush1.msra.mxu0 %v353
        %401 = vmatprep.subr.mxu0 %v352
        %402 = vmatpush1.msra.mxu0 %v351
        %403 = vmatprep.subr.mxu0 %v350
        %404 = vmatpush1.msra.mxu0 %v349
        %405 = vmatprep.subr.mxu0 %v348
        %406 = vmatpush1.msra.mxu0 %v347
        %407 = vmatprep.subr.mxu0 %v346
        %408 = vmatpush1.msra.mxu0 %v345
        %409 = vmatprep.subr.mxu0 %v344
        %410 = vmatpush1.msra.mxu0 %v343
        %411 = vmatprep.subr.mxu0 %v342
        %412 = vmatpush1.msra.mxu0 %v341
        %413 = vmatprep.subr.mxu0 %v340
        %414 = vmatpush1.msra.mxu0 %v339
        %415 = vmatprep.subr.mxu0 0.0
        %416 = vmatpush2.msra.mxu0 0.0
        %417 = vmatprep.subr.mxu0 0.0
        %418 = vmatpush2.msra.mxu0 0.0
        %419 = vmatprep.subr.mxu0 0.0
        %420 = vmatpush2.msra.mxu0 0.0
        %421 = vmatprep.subr.mxu0 0.0
        %422 = vmatpush2.msra.mxu0 0.0
        %423 = vmatprep.subr.mxu0 0.0
        %424 = vmatpush2.msra.mxu0 0.0
        %425 = vmatprep.subr.mxu0 0.0
        %426 = vmatpush2.msra.mxu0 0.0
        %427 = vmatprep.subr.mxu0 0.0
        %428 = vmatpush2.msra.mxu0 0.0
        %429 = vmatprep.subr.mxu0 0.0
        %430 = vmatpush2.msra.mxu0 0.0
        %431 = vmatprep.subr.mxu0 0.0
        %432 = vmatpush2.msra.mxu0 0.0
        %433 = vmatprep.subr.mxu0 0.0
        %434 = vmatpush2.msra.mxu0 0.0
        %435 = vmatprep.subr.mxu0 0.0
        %436 = vmatpush2.msra.mxu0 0.0
        %437 = vmatprep.subr.mxu0 0.0
        %438 = vmatpush2.msra.mxu0 0.0
        %439 = vmatprep.subr.mxu0 0.0
        %440 = vmatpush2.msra.mxu0 0.0
        %441 = vmatprep.subr.mxu0 0.0
        %442 = vmatpush2.msra.mxu0 0.0
        %443 = vmatprep.subr.mxu0 0.0
        %444 = vmatpush2.msra.mxu0 0.0
        %445 = vmatprep.subr.mxu0 0.0
        %446 = vmatpush2.msra.mxu0 0.0
        %447 = vmatprep.mubr.f32.mxu0 0.0
        %448 = vmatmul.mubr.f32.gmra.mxu0 %v338
        %v449 = vpop.f32.mrf.mxu0
        %v450 = vadd.f32 %v376, %v449
        %v451 = vpop.f32.mrf.mxu0
        %v452 = vadd.f32 %v380, %v451
        %453 = vdwg.mxu0
        %v454 = vmax.f32 %v450, 0.0
        %v455 = vxor.u32 %v452, 2147483648
        %v456 = vmul.f32 %v455, 1.442695
        %v457 = vpow.pop %v456
        %v458 = vadd.f32 %v457, 1.0
        %v459 = vrcp.pop %v458
        %v460 = vmul.f32 1.0, %v459
        %v461 = vsub.f32 %v454, %v338
        %v462 = vmul.f32 %v460, %v461
        %v463 = vadd.f32 %v338, %v462
        %v464 = vld [vmem:[#allocation7] sm:$0xff]
        %v465 = vld [vmem:[#allocation7 + $0x8] sm:$0xff]
        %v466 = vld [vmem:[#allocation7 + $0x10] sm:$0xff]
        %v467 = vld [vmem:[#allocation7 + $0x18] sm:$0xff]
        %v468 = vld [vmem:[#allocation7 + $0x20] sm:$0xff]
        %v469 = vld [vmem:[#allocation7 + $0x28] sm:$0xff]
        %v470 = vld [vmem:[#allocation7 + $0x30] sm:$0xff]
        %v471 = vld [vmem:[#allocation7 + $0x38] sm:$0xff]
        %v472 = vld [vmem:[#allocation7 + $0x40] sm:$0xff]
        %v473 = vld [vmem:[#allocation7 + $0x48] sm:$0xff]
        %v474 = vld [vmem:[#allocation7 + $0x50] sm:$0xff]
        %v475 = vld [vmem:[#allocation7 + $0x58] sm:$0xff]
        %v476 = vld [vmem:[#allocation7 + $0x60] sm:$0xff]
        %v477 = vld [vmem:[#allocation7 + $0x68] sm:$0xff]
        %v478 = vld [vmem:[#allocation7 + $0x70] sm:$0xff]
        %v479 = vld [vmem:[#allocation7 + $0x78] sm:$0xff]
        %v480 = vld [vmem:[#allocation7 + $0x80] sm:$0xff]
        %v481 = vld [vmem:[#allocation7 + $0x88] sm:$0xff]
        %v482 = vld [vmem:[#allocation7 + $0x90] sm:$0xff]
        %v483 = vld [vmem:[#allocation7 + $0x98] sm:$0xff]
        %v484 = vld [vmem:[#allocation7 + $0xa0] sm:$0xff]
        %v485 = vld [vmem:[#allocation7 + $0xa8] sm:$0xff]
        %v486 = vld [vmem:[#allocation7 + $0xb0] sm:$0xff]
        %v487 = vld [vmem:[#allocation7 + $0xb8] sm:$0xff]
        %v488 = vld [vmem:[#allocation7 + $0xc0] sm:$0xff]
        %v489 = vld [vmem:[#allocation7 + $0xc8] sm:$0xff]
        %v490 = vld [vmem:[#allocation7 + $0xd0] sm:$0xff]
        %v491 = vld [vmem:[#allocation7 + $0xd8] sm:$0xff]
        %v492 = vld [vmem:[#allocation7 + $0xe0] sm:$0xff]
        %v493 = vld [vmem:[#allocation7 + $0xe8] sm:$0xff]
        %v494 = vld [vmem:[#allocation7 + $0xf0] sm:$0xff]
        %v495 = vld [vmem:[#allocation7 + $0xf8] sm:$0xff]
        %v496 = vld [vmem:[%s4] sm:$0x3]
        %v498 = vlaneseq
        %v499 = vshrl.u32 %v498, 7
        %v500 = vsub.s32 0, %v499
        %v501 = vrot.slane %v496, %v500
        %v502 = vlaneseq
        %v503 = vshrl.u32 %v502, 7
        %v504 = vsub.s32 1, %v503
        %v505 = vrot.slane %v496, %v504
        %508 = vmatprep.subr.mxu0 %v495
        %509 = vmatpush1.msra.mxu0 %v494
        %510 = vmatprep.subr.mxu0 %v493
        %511 = vmatpush1.msra.mxu0 %v492
        %512 = vmatprep.subr.mxu0 %v491
        %513 = vmatpush1.msra.mxu0 %v490
        %514 = vmatprep.subr.mxu0 %v489
        %515 = vmatpush1.msra.mxu0 %v488
        %516 = vmatprep.subr.mxu0 %v487
        %517 = vmatpush1.msra.mxu0 %v486
        %518 = vmatprep.subr.mxu0 %v485
        %519 = vmatpush1.msra.mxu0 %v484
        %520 = vmatprep.subr.mxu0 %v483
        %521 = vmatpush1.msra.mxu0 %v482
        %522 = vmatprep.subr.mxu0 %v481
        %523 = vmatpush1.msra.mxu0 %v480
        %524 = vmatprep.subr.mxu0 %v479
        %525 = vmatpush1.msra.mxu0 %v478
        %526 = vmatprep.subr.mxu0 %v477
        %527 = vmatpush1.msra.mxu0 %v476
        %528 = vmatprep.subr.mxu0 %v475
        %529 = vmatpush1.msra.mxu0 %v474
        %530 = vmatprep.subr.mxu0 %v473
        %531 = vmatpush1.msra.mxu0 %v472
        %532 = vmatprep.subr.mxu0 %v471
        %533 = vmatpush1.msra.mxu0 %v470
        %534 = vmatprep.subr.mxu0 %v469
        %535 = vmatpush1.msra.mxu0 %v468
        %536 = vmatprep.subr.mxu0 %v467
        %537 = vmatpush1.msra.mxu0 %v466
        %538 = vmatprep.subr.mxu0 %v465
        %539 = vmatpush1.msra.mxu0 %v464
        %540 = vmatprep.subr.mxu0 0.0
        %541 = vmatpush2.msra.mxu0 0.0
        %542 = vmatprep.subr.mxu0 0.0
        %543 = vmatpush2.msra.mxu0 0.0
        %544 = vmatprep.subr.mxu0 0.0
        %545 = vmatpush2.msra.mxu0 0.0
        %546 = vmatprep.subr.mxu0 0.0
        %547 = vmatpush2.msra.mxu0 0.0
        %548 = vmatprep.subr.mxu0 0.0
        %549 = vmatpush2.msra.mxu0 0.0
        %550 = vmatprep.subr.mxu0 0.0
        %551 = vmatpush2.msra.mxu0 0.0
        %552 = vmatprep.subr.mxu0 0.0
        %553 = vmatpush2.msra.mxu0 0.0
        %554 = vmatprep.subr.mxu0 0.0
        %555 = vmatpush2.msra.mxu0 0.0
        %556 = vmatprep.subr.mxu0 0.0
        %557 = vmatpush2.msra.mxu0 0.0
        %558 = vmatprep.subr.mxu0 0.0
        %559 = vmatpush2.msra.mxu0 0.0
        %560 = vmatprep.subr.mxu0 0.0
        %561 = vmatpush2.msra.mxu0 0.0
        %562 = vmatprep.subr.mxu0 0.0
        %563 = vmatpush2.msra.mxu0 0.0
        %564 = vmatprep.subr.mxu0 0.0
        %565 = vmatpush2.msra.mxu0 0.0
        %566 = vmatprep.subr.mxu0 0.0
        %567 = vmatpush2.msra.mxu0 0.0
        %568 = vmatprep.subr.mxu0 0.0
        %569 = vmatpush2.msra.mxu0 0.0
        %570 = vmatprep.subr.mxu0 0.0
        %571 = vmatpush2.msra.mxu0 0.0
        %572 = vmatprep.mubr.f32.mxu0 0.0
        %573 = vmatmul.mubr.f32.gmra.mxu0 %v463
        %v574 = vpop.f32.mrf.mxu0
        %v575 = vadd.f32 %v501, %v574
        %v576 = vpop.f32.mrf.mxu0
        %v577 = vadd.f32 %v505, %v576
        %578 = vdwg.mxu0
        %v579 = vmax.f32 %v575, 0.0
        %v580 = vxor.u32 %v577, 2147483648
        %v581 = vmul.f32 %v580, 1.442695
        %v582 = vpow.pop %v581
        %v583 = vadd.f32 %v582, 1.0
        %v584 = vrcp.pop %v583
        %v585 = vmul.f32 1.0, %v584
        %v586 = vsub.f32 %v579, %v463
        %v587 = vmul.f32 %v585, %v586
        %v588 = vadd.f32 %v463, %v587
        %v589 = vld [vmem:[#allocation8] sm:$0xff]
        %v590 = vld [vmem:[#allocation8 + $0x8] sm:$0xff]
        %v591 = vld [vmem:[#allocation8 + $0x10] sm:$0xff]
        %v592 = vld [vmem:[#allocation8 + $0x18] sm:$0xff]
        %v593 = vld [vmem:[#allocation8 + $0x20] sm:$0xff]
        %v594 = vld [vmem:[#allocation8 + $0x28] sm:$0xff]
        %v595 = vld [vmem:[#allocation8 + $0x30] sm:$0xff]
        %v596 = vld [vmem:[#allocation8 + $0x38] sm:$0xff]
        %v597 = vld [vmem:[#allocation8 + $0x40] sm:$0xff]
        %v598 = vld [vmem:[#allocation8 + $0x48] sm:$0xff]
        %v599 = vld [vmem:[#allocation8 + $0x50] sm:$0xff]
        %v600 = vld [vmem:[#allocation8 + $0x58] sm:$0xff]
        %v601 = vld [vmem:[#allocation8 + $0x60] sm:$0xff]
        %v602 = vld [vmem:[#allocation8 + $0x68] sm:$0xff]
        %v603 = vld [vmem:[#allocation8 + $0x70] sm:$0xff]
        %v604 = vld [vmem:[#allocation8 + $0x78] sm:$0xff]
        %v605 = vld [vmem:[%s6] sm:$0x1]
        %v607 = vlaneseq
        %v608 = vshrl.u32 %v607, 7
        %v609 = vsub.s32 0, %v608
        %v610 = vrot.slane %v605, %v609
        %612 = vmatprep.subr.mxu0 0.0
        %613 = vmatpush1.msra.mxu0 %v604
        %614 = vmatprep.subr.mxu0 0.0
        %615 = vmatpush1.msra.mxu0 %v603
        %616 = vmatprep.subr.mxu0 0.0
        %617 = vmatpush1.msra.mxu0 %v602
        %618 = vmatprep.subr.mxu0 0.0
        %619 = vmatpush1.msra.mxu0 %v601
        %620 = vmatprep.subr.mxu0 0.0
        %621 = vmatpush1.msra.mxu0 %v600
        %622 = vmatprep.subr.mxu0 0.0
        %623 = vmatpush1.msra.mxu0 %v599
        %624 = vmatprep.subr.mxu0 0.0
        %625 = vmatpush1.msra.mxu0 %v598
        %626 = vmatprep.subr.mxu0 0.0
        %627 = vmatpush1.msra.mxu0 %v597
        %628 = vmatprep.subr.mxu0 0.0
        %629 = vmatpush1.msra.mxu0 %v596
        %630 = vmatprep.subr.mxu0 0.0
        %631 = vmatpush1.msra.mxu0 %v595
        %632 = vmatprep.subr.mxu0 0.0
        %633 = vmatpush1.msra.mxu0 %v594
        %634 = vmatprep.subr.mxu0 0.0
        %635 = vmatpush1.msra.mxu0 %v593
        %636 = vmatprep.subr.mxu0 0.0
        %637 = vmatpush1.msra.mxu0 %v592
        %638 = vmatprep.subr.mxu0 0.0
        %639 = vmatpush1.msra.mxu0 %v591
        %640 = vmatprep.subr.mxu0 0.0
        %641 = vmatpush1.msra.mxu0 %v590
        %642 = vmatprep.subr.mxu0 0.0
        %643 = vmatpush1.msra.mxu0 %v589
        %644 = vmatprep.subr.mxu0 0.0
        %645 = vmatpush2.msra.mxu0 0.0
        %646 = vmatprep.subr.mxu0 0.0
        %647 = vmatpush2.msra.mxu0 0.0
        %648 = vmatprep.subr.mxu0 0.0
        %649 = vmatpush2.msra.mxu0 0.0
        %650 = vmatprep.subr.mxu0 0.0
        %651 = vmatpush2.msra.mxu0 0.0
        %652 = vmatprep.subr.mxu0 0.0
        %653 = vmatpush2.msra.mxu0 0.0
        %654 = vmatprep.subr.mxu0 0.0
        %655 = vmatpush2.msra.mxu0 0.0
        %656 = vmatprep.subr.mxu0 0.0
        %657 = vmatpush2.msra.mxu0 0.0
        %658 = vmatprep.subr.mxu0 0.0
        %659 = vmatpush2.msra.mxu0 0.0
        %660 = vmatprep.subr.mxu0 0.0
        %661 = vmatpush2.msra.mxu0 0.0
        %662 = vmatprep.subr.mxu0 0.0
        %663 = vmatpush2.msra.mxu0 0.0
        %664 = vmatprep.subr.mxu0 0.0
        %665 = vmatpush2.msra.mxu0 0.0
        %666 = vmatprep.subr.mxu0 0.0
        %667 = vmatpush2.msra.mxu0 0.0
        %668 = vmatprep.subr.mxu0 0.0
        %669 = vmatpush2.msra.mxu0 0.0
        %670 = vmatprep.subr.mxu0 0.0
        %671 = vmatpush2.msra.mxu0 0.0
        %672 = vmatprep.subr.mxu0 0.0
        %673 = vmatpush2.msra.mxu0 0.0
        %674 = vmatprep.subr.mxu0 0.0
        %675 = vmatpush2.msra.mxu0 0.0
        %676 = vmatprep.mubr.f32.mxu0 0.0
        %677 = vmatmul.mubr.f32.gmra.mxu0 %v588
        %v678 = vpop.f32.mrf.mxu0
        %v679 = vadd.f32 %v610, %v678
        %v680 = vpop.f32.mrf.mxu0
        %681 = vdwg.mxu0
        %682 = vst [vmem:[%s337] sm:$0xff] %v679
        %s683 = sand.u32 %s186, 1
        %s684 = scalar_lea.sflag [#allocation4], %s683
        %s685 = sand.u32 %s186, 1
        %s686 = smul.addr %s685, 8
        %s687 = scalar_lea.vmem [#allocation10], %s686
        // Predicated region
        $region65: #{tpu_custom_call.1} parent=47 // pred_check
          %p688 = pneg %p196
        $region66: #{tpu_custom_call.1} parent=47 // pred_check_branch
          %690 = sbr.rel (%p688) target = $region68
        $region67: #{tpu_custom_call.1} parent=47 // pred_region
          %s692 = ssub.s32 128, 128
          %693 = vsyncadd %s684, %s692
          %s694 = smul.addr %s26, 128
          %s695 = scalar_lea.hbm %s7, %s694
          %s697 = sshll.u32 %s687, 4
          %s698 = int_to_ptr.vmem [resolvable:$true] %s697
          %700 = dma.vmem_to_hbm [thread:$0]  %s698, 128, %s695, %s684
        $region68: #{tpu_custom_call.1} parent=47 // pred_fallthru
          _
      $region48: #{tpu_custom_call.1} parent=5 // pred_fallthru
        _
      %p701 = scmp.le.s32.totalorder 2, %s21
      // Predicated region
      $region69: #{tpu_custom_call.1} parent=5 // pred_check
        %p702 = pneg %p701
      $region70: #{tpu_custom_call.1} parent=5 // pred_check_branch
        %704 = sbr.rel (%p702) target = $region72
      $region71: #{tpu_custom_call.1} parent=5 // pred_region
        %s705 = ssub.s32 %s21, 2
        // Predicated region
        $region73: #{tpu_custom_call.1} parent=71 // pred_check
          %p706 = pneg %p202
        $region74: #{tpu_custom_call.1} parent=71 // pred_check_branch
          %708 = sbr.rel (%p706) target = $region76
        $region75: #{tpu_custom_call.1} parent=71 // pred_region
          %s709 = sand.u32 %s187, 1
          %s710 = scalar_lea.sflag [#allocation4], %s709
          %s711 = sand.u32 %s187, 1
          %s712 = smul.addr %s711, 8
          %s713 = scalar_lea.vmem [#allocation10], %s712
          %714 = dma.done %s710, 128
        $region76: #{tpu_custom_call.1} parent=71 // pred_fallthru
          _
      $region72: #{tpu_custom_call.1} parent=5 // pred_fallthru
        _
    $region6: #{tpu_custom_call.1} parent=1 // loop_footer
      %s25 = sadd.s32 1, %s21
    $region7: #{tpu_custom_call.1} parent=1 // loop_footer_branch
      %20 = sbr.rel target = $region3
    $region8: #{tpu_custom_call.1} parent=1 // loop_exit
      _
    %715 = vsyncpa [#allocation3], 1
    %s716 = scalar_lea.sflag [#allocation3], 1
    %717 = vsyncpa %s716, 1
    %718 = vsyncpa [#allocation6], 1
    %719 = vsyncpa [#allocation9], 1
    %720 = vsyncpa [#allocation4], 1
    %s721 = scalar_lea.sflag [#allocation4], 1
    %722 = vsyncpa %s721, 1

</llo_original>
